<compile_context>
chip_gen: v5e
topology: v5e:2x2
jax: 0.10.0
libtpu: 0.0.40
codegen_flags: <defaults>
</compile_context>

<pallas_src>
import functools

import jax
import jax.numpy as jnp
from jax import lax
from jax.experimental import pallas as pl
from jax.experimental.pallas import tpu as pltpu


def _round_up(x, m):
    return ((x + m - 1) // m) * m


def _query_vmem_capacity_bytes():
    try:
        cap = int(pltpu.get_tpu_info().vmem_capacity_bytes)
        if cap > 0:
            return cap
    except Exception:
        pass
    return 64 * 1024 * 1024  # conservative default: v7x per-TensorCore VMEM


_VMEM_CAP = _query_vmem_capacity_bytes()


# --------------------------------------------------------------------------- #
# Stage 1: streaming sequence-sum (partial sums per parallel slice)            #
# --------------------------------------------------------------------------- #
def _seqsum_kernel(code_ref, psum_ref, *, s_tile, s_per_part, seq_len,
                   needs_mask):
    # code_ref : [B, s_tile, Ec]   one streamed sequence tile (any dtype)
    # psum_ref : [B, Ec] f32       partial sum for this parallel slice
    s = pl.program_id(1)

    @pl.when(s == 0)
    def _init():
        psum_ref[...] = jnp.zeros_like(psum_ref)

    blk = code_ref[...].astype(jnp.float32)            # f32 accumulate path
    if needs_mask:
        # True sequence offset of row 0 of this tile (UNclamped), used to zero
        # both the S-tail rows and any fully out-of-range re-read block.
        p = pl.program_id(0)
        start = (p * s_per_part + s) * s_tile
        row = lax.broadcasted_iota(jnp.int32, blk.shape, 1)
        blk = jnp.where(row < (seq_len - start), blk, 0.0)
    psum_ref[...] += jnp.sum(blk, axis=1)


# --------------------------------------------------------------------------- #
# Stage 2: projections + normalize + similarity + symmetric CE loss            #
# --------------------------------------------------------------------------- #
def _align_head_kernel(i_emb_ref, psum_ref, wv_ref, bv_ref, wc_ref, bc_ref,
                       loss_ref, *, n_par):
    # i_emb_ref : [B, Ev]            vision embeddings
    # psum_ref  : [n_par, B, Ec] f32 per-slice sequence sums
    # wv_ref    : [Ev, D_pad] f32    vision->common weight ([in, out])
    # bv_ref    : [1, D_pad]  f32
    # wc_ref    : [Ec, D_pad] f32    code->common weight ([in, out])
    # bc_ref    : [1, D_pad]  f32
    # loss_ref  : [1, 1]             SMEM scalar output
    f32 = jnp.float32
    hp = lax.Precision.HIGHEST

    i_emb = i_emb_ref[...].astype(f32)                 # [B, Ev]
    c_emb = psum_ref[0]                                # [B, Ec] f32
    for k in range(1, n_par):
        c_emb = c_emb + psum_ref[k]

    # Two separate MXU dots (no [2B, E] concat copy, no wasted off-diag FLOPs).
    i_proj = jnp.dot(i_emb, wv_ref[...], preferred_element_type=f32,
                     precision=hp) + bv_ref[...]
    c_proj = jnp.dot(c_emb, wc_ref[...], preferred_element_type=f32,
                     precision=hp) + bc_ref[...]

    # F.normalize: x / max(||x||, 1e-12)  ==  x * rsqrt(max(sumsq, 1e-24)).
    # D padding lanes are exactly zero, so norms / dots are unchanged.
    eps2 = f32(1e-24)
    i_nrm = i_proj * lax.rsqrt(
        jnp.maximum(jnp.sum(i_proj * i_proj, axis=-1, keepdims=True), eps2))
    c_nrm = c_proj * lax.rsqrt(
        jnp.maximum(jnp.sum(c_proj * c_proj, axis=-1, keepdims=True), eps2))

    # logits = I_emb_com @ C_emb_com.T (contract the common dim, no transpose).
    logits = lax.dot_general(i_nrm, c_nrm, (((1,), (1,)), ((), ())),
                             preferred_element_type=f32, precision=hp)  # [B,B]

    # Diagonal directly from the normalized embeddings (no iota masks).
    diag = jnp.sum(i_nrm * c_nrm, axis=-1, keepdims=True)                # [B,1]

    # One exp pass serves both row and column logsumexp. |logits| <= 1, so a
    # single global-max shift is as stable as per-row/column max.
    m_g = jnp.max(logits)
    e = jnp.exp(logits - m_g)
    lse_r = m_g + jnp.log(jnp.sum(e, axis=1, keepdims=True))             # [B,1]
    lse_c = m_g + jnp.log(jnp.sum(e, axis=0, keepdims=True))             # [1,B]

    # loss = 0.5*(CE(logits, arange) + CE(logits.T, arange))
    #      = 0.5*(mean(lse_r) + mean(lse_c)) - mean(diag)
    loss_ref[0, 0] = (0.5 * (jnp.mean(lse_r) + jnp.mean(lse_c))
                      - jnp.mean(diag))


# --------------------------------------------------------------------------- #
# Wrapper: tiling decisions + the two pallas_calls                             #
# --------------------------------------------------------------------------- #
@functools.partial(jax.jit, static_argnames=("s_tile", "block_budget_bytes"))
def alignment_loss_pallas(i_emb, code_output, wv, bv, wc, bc, *,
                          s_tile=None, block_budget_bytes=None):
    """Alignment head + loss.
    i_emb: [B, Ev]; code_output: [B, S, Ec] (batch first, any float dtype);
    wv: [Ev, D], wc: [Ec, D] ([in, out] layout); biases: [D] or [1, D]."""
    B, Ev = i_emb.shape
    Bc, S, Ec = code_output.shape
    assert B == Bc, "Requires batch first!"
    D = wv.shape[1]
    assert wc.shape[1] == D and wv.shape[0] == Ev and wc.shape[0] == Ec

    f32 = jnp.float32
    # Pad ONLY the tiny weight/bias tensors to a lane-dense common dim.
    D_pad = _round_up(D, 128)
    wv_p = jnp.zeros((Ev, D_pad), f32).at[:, :D].set(wv.astype(f32))
    wc_p = jnp.zeros((Ec, D_pad), f32).at[:, :D].set(wc.astype(f32))
    bv_p = jnp.zeros((1, D_pad), f32).at[:, :D].set(bv.reshape(1, D).astype(f32))
    bc_p = jnp.zeros((1, D_pad), f32).at[:, :D].set(bc.reshape(1, D).astype(f32))

    # ---- generation-aware sequence tiling (no HBM copy of code_output) -----
    itemsize = jnp.dtype(code_output.dtype).itemsize
    sublane = max(8, 32 // itemsize)                 # 8 f32 / 16 bf16 / 32 int8
    if block_budget_bytes is None:
        block_budget_bytes = min(24 << 20, max(8 << 20, _VMEM_CAP // 6))
    per_row_bytes = max(1, B * Ec * itemsize)
    if s_tile is None:
        s_tile = max(sublane,
                     (block_budget_bytes // per_row_bytes) // sublane * sublane)
    if s_tile >= S:
        s_tile = S                                   # full-dim block: always legal
    else:
        s_tile = max(8, (s_tile // 8) * 8)           # second-minor dim: mult of 8

    num_s = -(-S // s_tile)
    n_par = 2 if num_s >= 2 else 1                   # v7x: one slice per TensorCore
    s_per_part = -(-num_s // n_par)
    needs_mask = (n_par * s_per_part * s_tile != S)

    if n_par * s_per_part == num_s:
        code_index_map = lambda p, s: (0, p * s_per_part + s, 0)
    else:
        last_blk = num_s - 1                         # clamp excess positions
        code_index_map = lambda p, s: (0, jnp.minimum(p * s_per_part + s,
                                                      last_blk), 0)

    # VMEM limits computed from the actual block sizes (clamped to the chip).
    code_block_bytes = B * s_tile * Ec * itemsize
    psum_bytes = B * Ec * 4
    vmem1 = int(min(max(3 * code_block_bytes + 4 * psum_bytes + (4 << 20),
                        32 << 20),
                    int(0.9 * _VMEM_CAP)))
    w_bytes = (Ev + Ec + 2) * D_pad * 4
    in2_bytes = (B * Ev * jnp.dtype(i_emb.dtype).itemsize
                 + n_par * psum_bytes + w_bytes)
    vmem2 = int(min(max(2 * in2_bytes + 6 * B * D_pad * 4 + 4 * B * B * 4
                        + (4 << 20), 16 << 20),
                    int(0.9 * _VMEM_CAP)))

    # ---- stage 1: streaming sequence-sum (memory-bound hot path) -----------
    psum = pl.pallas_call(
        functools.partial(_seqsum_kernel, s_tile=s_tile, s_per_part=s_per_part,
                          seq_len=S, needs_mask=needs_mask),
        out_shape=jax.ShapeDtypeStruct((n_par, B, Ec), jnp.float32),
        grid_spec=pltpu.PrefetchScalarGridSpec(
            num_scalar_prefetch=0,
            grid=(n_par, s_per_part),
            in_specs=[pl.BlockSpec((B, s_tile, Ec), code_index_map)],
            out_specs=pl.BlockSpec((None, B, Ec), lambda p, s: (p, 0, 0)),
        ),
        compiler_params=pltpu.CompilerParams(
            dimension_semantics=("parallel", "arbitrary"),
            vmem_limit_bytes=vmem1,
        ),
    )(code_output)

    # ---- stage 2: tiny one-shot epilogue ------------------------------------
    loss = pl.pallas_call(
        functools.partial(_align_head_kernel, n_par=n_par),
        out_shape=jax.ShapeDtypeStruct((1, 1), jnp.float32),
        grid_spec=pltpu.PrefetchScalarGridSpec(
            num_scalar_prefetch=0,
            grid=(1,),
            in_specs=[
                pl.BlockSpec((B, Ev), lambda i: (0, 0)),
                pl.BlockSpec((n_par, B, Ec), lambda i: (0, 0, 0)),
                pl.BlockSpec((Ev, D_pad), lambda i: (0, 0)),
                pl.BlockSpec((1, D_pad), lambda i: (0, 0)),
                pl.BlockSpec((Ec, D_pad), lambda i: (0, 0)),
                pl.BlockSpec((1, D_pad), lambda i: (0, 0)),
            ],
            out_specs=pl.BlockSpec((1, 1), lambda i: (0, 0),
                                   memory_space=pltpu.MemorySpace.SMEM),
        ),
        compiler_params=pltpu.CompilerParams(
            dimension_semantics=("arbitrary",),
            vmem_limit_bytes=vmem2,
        ),
    )(i_emb, psum, wv_p, bv_p, wc_p, bc_p)
    return loss[0, 0]


# --------------------------------------------------------------------------- #
# Synthetic sub-encoders (plain-JAX glue; external to the module)              #
# --------------------------------------------------------------------------- #
def vision_encoder(params, image):
    # image: [B, C, H, W] (NCHW) -> [B, E_vis]
    pooled = jnp.mean(image, axis=(2, 3))                            # [B, C]
    return pooled @ params["w"] + params["b"]


def code_encoder(params, input_ids, hidden):
    # input_ids: [B, S] int32, hidden: [B, E_code]
    # returns (output [B, S, E_code] batch-first, hidden).
    emb = params["embed"][input_ids]                                 # [B, S, E]

    def step(h, x_t):
        h_new = jnp.tanh(x_t @ params["wxh"] + h @ params["whh"] + params["bh"])
        return h_new, h_new

    hidden_f, outs = lax.scan(step, hidden, jnp.swapaxes(emb, 0, 1))
    # Emit a bf16 activation stream: halves the dominant HBM traffic of the
    # alignment kernel; the kernel accumulates in f32.
    return jnp.swapaxes(outs, 0, 1).astype(jnp.bfloat16), hidden_f


# --------------------------------------------------------------------------- #
# Pure-JAX reference of the alignment head (correctness check)                 #
# --------------------------------------------------------------------------- #
def reference_loss(i_emb, code_output, wv, bv, wc, bc):
    hp = lax.Precision.HIGHEST
    c_emb = jnp.sum(code_output.astype(jnp.float32), axis=1)
    i_p = jnp.dot(i_emb.astype(jnp.float32), wv, precision=hp) + bv
    c_p = jnp.dot(c_emb, wc, precision=hp) + bc
    i_n = i_p / jnp.maximum(jnp.linalg.norm(i_p, axis=1, keepdims=True), 1e-12)
    c_n = c_p / jnp.maximum(jnp.linalg.norm(c_p, axis=1, keepdims=True), 1e-12)
    logits = jnp.dot(i_n, c_n.T, precision=hp)
    labels = jnp.arange(logits.shape[0])

    def ce(lg):
        lse = jax.scipy.special.logsumexp(lg, axis=1)
        return jnp.mean(lse - lg[jnp.arange(lg.shape[0]), labels])

    return (ce(logits.T) + ce(logits)) / 2.0


# --------------------------------------------------------------------------- #
if __name__ == "__main__":
    B, C, H, W = 2, 4, 16, 16          # batch, channels, spatial
    S, VOCAB = 8, 50                   # code sequence length, vocab size
    E_VIS, E_CODE, D_COMMON = 32, 32, 16

    key = jax.random.PRNGKey(0)
    keys = jax.random.split(key, 10)

    # Inputs (x = {'image': ..., 'input_ids': ...}) and initial hidden state.
    image = jax.random.normal(keys[0], (B, C, H, W), jnp.float32)
    input_ids = jax.random.randint(keys[1], (B, S), 0, VOCAB)
    hidden0 = jnp.zeros((B, E_CODE), jnp.float32)

    # Synthetic encoder parameters (deterministic).
    vis_params = {
        "w": 0.1 * jax.random.normal(keys[2], (C, E_VIS), jnp.float32),
        "b": jnp.zeros((E_VIS,), jnp.float32),
    }
    code_params = {
        "embed": 0.1 * jax.random.normal(keys[3], (VOCAB, E_CODE), jnp.float32),
        "wxh": 0.1 * jax.random.normal(keys[4], (E_CODE, E_CODE), jnp.float32),
        "whh": 0.1 * jax.random.normal(keys[5], (E_CODE, E_CODE), jnp.float32),
        "bh": jnp.zeros((E_CODE,), jnp.float32),
    }

    # Projection heads: uniform(-0.1, 0.1) weights, zero bias (== init_weights).
    wv = jax.random.uniform(keys[6], (E_VIS, D_COMMON), jnp.float32, -0.1, 0.1)
    bv = jnp.zeros((1, D_COMMON), jnp.float32)
    wc = jax.random.uniform(keys[7], (E_CODE, D_COMMON), jnp.float32, -0.1, 0.1)
    bc = jnp.zeros((1, D_COMMON), jnp.float32)

    # Forward pass: encoders (glue) -> Pallas alignment kernels (hot path).
    i_emb = vision_encoder(vis_params, image)                 # [B, E_VIS]
    output, hidden = code_encoder(code_params, input_ids, hidden0)

    loss = alignment_loss_pallas(i_emb, output, wv, bv, wc, bc)
    loss = jax.block_until_ready(loss)
    hidden = jax.block_until_ready(hidden)                    # returned alongside loss

    ref = reference_loss(i_emb, output, wv, bv, wc, bc)
    assert jnp.isfinite(loss), "loss is not finite"
    assert jnp.allclose(loss, ref, atol=5e-5, rtol=5e-5), (loss, ref)

    # Second check: exercise the multi-block / 2-way-split / tail-mask path
    # (S=20 with a forced 8-row tile -> 3 blocks split over 2 parallel slices).
    S2 = 20
    output2 = (0.1 * jax.random.normal(keys[8], (B, S2, E_CODE), jnp.float32)
               ).astype(jnp.bfloat16)
    loss2 = alignment_loss_pallas(i_emb, output2, wv, bv, wc, bc, s_tile=8)
    loss2 = jax.block_until_ready(loss2)
    ref2 = reference_loss(i_emb, output2, wv, bv, wc, bc)
    assert jnp.isfinite(loss2), "loss2 is not finite"
    assert jnp.allclose(loss2, ref2, atol=5e-5, rtol=5e-5), (loss2, ref2)

    print("KERNEL_OK")
</pallas_src>

<mosaic_0001>
module attributes {stable_mosaic.version = 11 : i64} {
  func.func @_seqsum_kernel(%arg0: i32, %arg1: i32, %arg2: memref<2x8x32xbf16, #tpu.memory_space<vmem>>, %arg3: memref<1x2x32xf32, #tpu.memory_space<vmem>>) attributes {dimension_semantics = [#tpu.dimension_semantics<parallel>, #tpu.dimension_semantics<arbitrary>], iteration_bounds = array<i64: 1, 1>, scalar_prefetch = 0 : i64, scratch_operands = 0 : i64, tpu.core_type = #tpu.core_type<tc>, window_params = [{transform_indices = @transform_0, window_bounds = array<i64: 2, 8, 32>}, {transform_indices = @transform_1, window_bounds = array<i64: 1, 2, 32>}]} {
    %c0_i32 = arith.constant 0 : i32
    %0 = arith.cmpi eq, %arg1, %c0_i32 : i32
    %1 = arith.extui %0 : i1 to i32
    %c0_i32_0 = arith.constant 0 : i32
    %2 = arith.cmpi ne, %1, %c0_i32_0 : i32
    scf.if %2 {
      %cst_9 = arith.constant 0.000000e+00 : f32
      %12 = vector.broadcast %cst_9 : f32 to vector<2x32xf32>
      %c0_10 = arith.constant 0 : index
      %c0_11 = arith.constant 0 : index
      %c0_12 = arith.constant 0 : index
      %13 = vector.load %arg3[%c0_10, %c0_11, %c0_12] : memref<1x2x32xf32, #tpu.memory_space<vmem>>, vector<1x2x32xf32>
      %14 = vector.shape_cast %13 : vector<1x2x32xf32> to vector<2x32xf32>
      %15 = vector.shape_cast %12 : vector<2x32xf32> to vector<1x2x32xf32>
      tpu.vector_store %arg3[%c0_10, %c0_11, %c0_12], %15 {strides = array<i32>} : memref<1x2x32xf32, #tpu.memory_space<vmem>>, vector<1x2x32xf32>,
    } else {
    }
    %c0 = arith.constant 0 : index
    %c0_1 = arith.constant 0 : index
    %c0_2 = arith.constant 0 : index
    %3 = vector.load %arg2[%c0, %c0_1, %c0_2] : memref<2x8x32xbf16, #tpu.memory_space<vmem>>, vector<2x8x32xbf16>
    %4 = arith.extf %3 : vector<2x8x32xbf16> to vector<2x8x32xf32>
    %c0_3 = arith.constant 0 : index
    %c0_4 = arith.constant 0 : index
    %c0_5 = arith.constant 0 : index
    %5 = vector.load %arg3[%c0_3, %c0_4, %c0_5] : memref<1x2x32xf32, #tpu.memory_space<vmem>>, vector<1x2x32xf32>
    %6 = vector.shape_cast %5 : vector<1x2x32xf32> to vector<2x32xf32>
    %cst = arith.constant dense<0.000000e+00> : vector<2x32xf32>
    %7 = vector.multi_reduction <add>, %4, %cst [1] : vector<2x8x32xf32> to vector<2x32xf32>
    %8 = arith.addf %6, %7 : vector<2x32xf32>
    %c0_6 = arith.constant 0 : index
    %c0_7 = arith.constant 0 : index
    %c0_8 = arith.constant 0 : index
    %9 = vector.load %arg3[%c0_6, %c0_7, %c0_8] : memref<1x2x32xf32, #tpu.memory_space<vmem>>, vector<1x2x32xf32>
    %10 = vector.shape_cast %9 : vector<1x2x32xf32> to vector<2x32xf32>
    %11 = vector.shape_cast %8 : vector<2x32xf32> to vector<1x2x32xf32>
    tpu.vector_store %arg3[%c0_6, %c0_7, %c0_8], %11 {strides = array<i32>} : memref<1x2x32xf32, #tpu.memory_space<vmem>>, vector<1x2x32xf32>,
    return
  }
  func.func @transform_0(%arg0: i32, %arg1: i32) -> (i32, i32, i32) {
    %c1_i32 = arith.constant 1 : i32
    %0 = arith.muli %arg0, %c1_i32 : i32
    %1 = arith.addi %0, %arg1 : i32
    %c0_i32 = arith.constant 0 : i32
    %c0_i32_0 = arith.constant 0 : i32
    %c0_i32_1 = arith.constant 0 : i32
    return %c0_i32, %1, %c0_i32_0 : i32, i32, i32
  }
  func.func @transform_1(%arg0: i32, %arg1: i32) -> (i32, i32, i32) {
    %c0_i32 = arith.constant 0 : i32
    %c0_i32_0 = arith.constant 0 : i32
    %c0_i32_1 = arith.constant 0 : i32
    return %arg0, %c0_i32, %c0_i32_0 : i32, i32, i32
  }
}

module attributes {stable_mosaic.version = 11 : i64} {
  func.func @_align_head_kernel(%arg0: i32, %arg1: memref<2x32xf32, #tpu.memory_space<vmem>>, %arg2: memref<1x2x32xf32, #tpu.memory_space<vmem>>, %arg3: memref<32x128xf32, #tpu.memory_space<vmem>>, %arg4: memref<1x128xf32, #tpu.memory_space<vmem>>, %arg5: memref<32x128xf32, #tpu.memory_space<vmem>>, %arg6: memref<1x128xf32, #tpu.memory_space<vmem>>, %arg7: memref<1x1xf32, #tpu.memory_space<smem>>) attributes {dimension_semantics = [#tpu.dimension_semantics<arbitrary>], iteration_bounds = array<i64: 1>, scalar_prefetch = 0 : i64, scratch_operands = 0 : i64, tpu.core_type = #tpu.core_type<tc>, window_params = [{pipeline_mode = #tpu.pipeline_mode<synchronous>, transform_indices = @transform_0, window_bounds = array<i64: 2, 32>}, {pipeline_mode = #tpu.pipeline_mode<synchronous>, transform_indices = @transform_1, window_bounds = array<i64: 1, 2, 32>}, {pipeline_mode = #tpu.pipeline_mode<synchronous>, transform_indices = @transform_2, window_bounds = array<i64: 32, 128>}, {pipeline_mode = #tpu.pipeline_mode<synchronous>, transform_indices = @transform_3, window_bounds = array<i64: 1, 128>}, {pipeline_mode = #tpu.pipeline_mode<synchronous>, transform_indices = @transform_4, window_bounds = array<i64: 32, 128>}, {pipeline_mode = #tpu.pipeline_mode<synchronous>, transform_indices = @transform_5, window_bounds = array<i64: 1, 128>}, {transform_indices = @transform_6, window_bounds = array<i64: 1, 1>}]} {
    %c0 = arith.constant 0 : index
    %c0_0 = arith.constant 0 : index
    %0 = vector.load %arg1[%c0, %c0_0] : memref<2x32xf32, #tpu.memory_space<vmem>>, vector<2x32xf32>
    %c0_1 = arith.constant 0 : index
    %c0_2 = arith.constant 0 : index
    %c0_3 = arith.constant 0 : index
    %1 = vector.load %arg2[%c0_1, %c0_2, %c0_3] : memref<1x2x32xf32, #tpu.memory_space<vmem>>, vector<1x2x32xf32>
    %2 = vector.shape_cast %1 : vector<1x2x32xf32> to vector<2x32xf32>
    %c0_4 = arith.constant 0 : index
    %c0_5 = arith.constant 0 : index
    %3 = vector.load %arg3[%c0_4, %c0_5] : memref<32x128xf32, #tpu.memory_space<vmem>>, vector<32x128xf32>
    %cst = arith.constant dense<0.000000e+00> : vector<2x128xf32>
    %4 = tpu.matmul %0, %3, %cst {dimension_numbers = #tpu.dot_dimension_numbers<[1], [0], [0], [1], [0, 0, 1, 1], [], []>, precision = #tpu.contract_precision<fp32>} : vector<2x32xf32>, vector<32x128xf32>, vector<2x128xf32> -> vector<2x128xf32>
    %c0_6 = arith.constant 0 : index
    %c0_7 = arith.constant 0 : index
    %5 = vector.load %arg4[%c0_6, %c0_7] : memref<1x128xf32, #tpu.memory_space<vmem>>, vector<1x128xf32>
    %6 = vector.broadcast %5 : vector<1x128xf32> to vector<2x128xf32>
    %7 = arith.addf %4, %6 : vector<2x128xf32>
    %c0_8 = arith.constant 0 : index
    %c0_9 = arith.constant 0 : index
    %8 = vector.load %arg5[%c0_8, %c0_9] : memref<32x128xf32, #tpu.memory_space<vmem>>, vector<32x128xf32>
    %cst_10 = arith.constant dense<0.000000e+00> : vector<2x128xf32>
    %9 = tpu.matmul %2, %8, %cst_10 {dimension_numbers = #tpu.dot_dimension_numbers<[1], [0], [0], [1], [0, 0, 1, 1], [], []>, precision = #tpu.contract_precision<fp32>} : vector<2x32xf32>, vector<32x128xf32>, vector<2x128xf32> -> vector<2x128xf32>
    %c0_11 = arith.constant 0 : index
    %c0_12 = arith.constant 0 : index
    %10 = vector.load %arg6[%c0_11, %c0_12] : memref<1x128xf32, #tpu.memory_space<vmem>>, vector<1x128xf32>
    %11 = vector.broadcast %10 : vector<1x128xf32> to vector<2x128xf32>
    %12 = arith.addf %9, %11 : vector<2x128xf32>
    %13 = arith.mulf %7, %7 : vector<2x128xf32>
    %cst_13 = arith.constant dense<0.000000e+00> : vector<2xf32>
    %14 = vector.multi_reduction <add>, %13, %cst_13 [1] : vector<2x128xf32> to vector<2xf32>
    %15 = vector.shape_cast %14 : vector<2xf32> to vector<2x1xf32>
    %cst_14 = arith.constant 1.000000e-24 : f32
    %16 = vector.broadcast %cst_14 : f32 to vector<2x1xf32>
    %17 = arith.maximumf %15, %16 : vector<2x1xf32>
    %18 = math.rsqrt %17 : vector<2x1xf32>
    %19 = vector.broadcast %18 : vector<2x1xf32> to vector<2x128xf32>
    %20 = arith.mulf %7, %19 : vector<2x128xf32>
    %21 = arith.mulf %12, %12 : vector<2x128xf32>
    %cst_15 = arith.constant dense<0.000000e+00> : vector<2xf32>
    %22 = vector.multi_reduction <add>, %21, %cst_15 [1] : vector<2x128xf32> to vector<2xf32>
    %23 = vector.shape_cast %22 : vector<2xf32> to vector<2x1xf32>
    %cst_16 = arith.constant 1.000000e-24 : f32
    %24 = vector.broadcast %cst_16 : f32 to vector<2x1xf32>
    %25 = arith.maximumf %23, %24 : vector<2x1xf32>
    %26 = math.rsqrt %25 : vector<2x1xf32>
    %27 = vector.broadcast %26 : vector<2x1xf32> to vector<2x128xf32>
    %28 = arith.mulf %12, %27 : vector<2x128xf32>
    %cst_17 = arith.constant dense<0.000000e+00> : vector<2x2xf32>
    %29 = tpu.matmul %20, %28, %cst_17 {dimension_numbers = #tpu.dot_dimension_numbers<[1], [1], [0], [0], [0, 0, 1, 0], [], []>, precision = #tpu.contract_precision<fp32>} : vector<2x128xf32>, vector<2x128xf32>, vector<2x2xf32> -> vector<2x2xf32>
    %30 = arith.mulf %20, %28 : vector<2x128xf32>
    %cst_18 = arith.constant dense<0.000000e+00> : vector<2xf32>
    %31 = vector.multi_reduction <add>, %30, %cst_18 [1] : vector<2x128xf32> to vector<2xf32>
    %32 = vector.shape_cast %31 : vector<2xf32> to vector<2x1xf32>
    %33 = vector.shape_cast %29 : vector<2x2xf32> to vector<1x2x2xf32>
    %cst_19 = arith.constant dense<0xFF800000> : vector<1xf32>
    %34 = vector.multi_reduction <maximumf>, %33, %cst_19 [1, 2] : vector<1x2x2xf32> to vector<1xf32>
    %35 = vector.shape_cast %34 : vector<1xf32> to vector<1x1x1xf32>
    %36 = vector.extract %35[0, 0, 0] : f32 from vector<1x1x1xf32>
    %37 = vector.broadcast %36 : f32 to vector<2x2xf32>
    %38 = arith.subf %29, %37 : vector<2x2xf32>
    %39 = math.exp %38 : vector<2x2xf32>
    %cst_20 = arith.constant dense<0.000000e+00> : vector<2xf32>
    %40 = vector.multi_reduction <add>, %39, %cst_20 [1] : vector<2x2xf32> to vector<2xf32>
    %41 = vector.shape_cast %40 : vector<2xf32> to vector<2x1xf32>
    %42 = math.log %41 : vector<2x1xf32>
    %43 = vector.broadcast %36 : f32 to vector<2x1xf32>
    %44 = arith.addf %43, %42 : vector<2x1xf32>
    %cst_21 = arith.constant dense<0.000000e+00> : vector<2xf32>
    %45 = vector.multi_reduction <add>, %39, %cst_21 [0] : vector<2x2xf32> to vector<2xf32>
    %46 = vector.shape_cast %45 : vector<2xf32> to vector<1x2xf32>
    %47 = math.log %46 : vector<1x2xf32>
    %48 = vector.broadcast %36 : f32 to vector<1x2xf32>
    %49 = arith.addf %48, %47 : vector<1x2xf32>
    %50 = vector.shape_cast %44 : vector<2x1xf32> to vector<1x2x1xf32>
    %cst_22 = arith.constant dense<0.000000e+00> : vector<1xf32>
    %51 = vector.multi_reduction <add>, %50, %cst_22 [1, 2] : vector<1x2x1xf32> to vector<1xf32>
    %52 = vector.shape_cast %51 : vector<1xf32> to vector<1x1x1xf32>
    %53 = vector.extract %52[0, 0, 0] : f32 from vector<1x1x1xf32>
    %cst_23 = arith.constant 2.000000e+00 : f32
    %54 = arith.divf %53, %cst_23 : f32
    %55 = vector.shape_cast %49 : vector<1x2xf32> to vector<1x1x2xf32>
    %cst_24 = arith.constant dense<0.000000e+00> : vector<1xf32>
    %56 = vector.multi_reduction <add>, %55, %cst_24 [1, 2] : vector<1x1x2xf32> to vector<1xf32>
    %57 = vector.shape_cast %56 : vector<1xf32> to vector<1x1x1xf32>
    %58 = vector.extract %57[0, 0, 0] : f32 from vector<1x1x1xf32>
    %cst_25 = arith.constant 2.000000e+00 : f32
    %59 = arith.divf %58, %cst_25 : f32
    %60 = arith.addf %54, %59 : f32
    %cst_26 = arith.constant 5.000000e-01 : f32
    %61 = arith.mulf %cst_26, %60 : f32
    %62 = vector.shape_cast %32 : vector<2x1xf32> to vector<1x2x1xf32>
    %cst_27 = arith.constant dense<0.000000e+00> : vector<1xf32>
    %63 = vector.multi_reduction <add>, %62, %cst_27 [1, 2] : vector<1x2x1xf32> to vector<1xf32>
    %64 = vector.shape_cast %63 : vector<1xf32> to vector<1x1x1xf32>
    %65 = vector.extract %64[0, 0, 0] : f32 from vector<1x1x1xf32>
    %cst_28 = arith.constant 2.000000e+00 : f32
    %66 = arith.divf %65, %cst_28 : f32
    %67 = arith.subf %61, %66 : f32
    %c0_29 = arith.constant 0 : index
    %c0_30 = arith.constant 0 : index
    %68 = memref.load %arg7[%c0_29, %c0_30] : memref<1x1xf32, #tpu.memory_space<smem>>
    memref.store %67, %arg7[%c0_29, %c0_30] : memref<1x1xf32, #tpu.memory_space<smem>>
    return
  }
  func.func @transform_0(%arg0: i32) -> (i32, i32) {
    %c0_i32 = arith.constant 0 : i32
    %c0_i32_0 = arith.constant 0 : i32
    %c0_i32_1 = arith.constant 0 : i32
    return %c0_i32, %c0_i32_0 : i32, i32
  }
  func.func @transform_1(%arg0: i32) -> (i32, i32, i32) {
    %c0_i32 = arith.constant 0 : i32
    %c0_i32_0 = arith.constant 0 : i32
    %c0_i32_1 = arith.constant 0 : i32
    %c0_i32_2 = arith.constant 0 : i32
    return %c0_i32, %c0_i32_0, %c0_i32_1 : i32, i32, i32
  }
  func.func @transform_2(%arg0: i32) -> (i32, i32) {
    %c0_i32 = arith.constant 0 : i32
    %c0_i32_0 = arith.constant 0 : i32
    %c0_i32_1 = arith.constant 0 : i32
    return %c0_i32, %c0_i32_0 : i32, i32
  }
  func.func @transform_3(%arg0: i32) -> (i32, i32) {
    %c0_i32 = arith.constant 0 : i32
    %c0_i32_0 = arith.constant 0 : i32
    %c0_i32_1 = arith.constant 0 : i32
    return %c0_i32, %c0_i32_0 : i32, i32
  }
  func.func @transform_4(%arg0: i32) -> (i32, i32) {
    %c0_i32 = arith.constant 0 : i32
    %c0_i32_0 = arith.constant 0 : i32
    %c0_i32_1 = arith.constant 0 : i32
    return %c0_i32, %c0_i32_0 : i32, i32
  }
  func.func @transform_5(%arg0: i32) -> (i32, i32) {
    %c0_i32 = arith.constant 0 : i32
    %c0_i32_0 = arith.constant 0 : i32
    %c0_i32_1 = arith.constant 0 : i32
    return %c0_i32, %c0_i32_0 : i32, i32
  }
  func.func @transform_6(%arg0: i32) -> (i32, i32) {
    %c0_i32 = arith.constant 0 : i32
    %c0_i32_0 = arith.constant 0 : i32
    %c0_i32_1 = arith.constant 0 : i32
    return %c0_i32, %c0_i32_0 : i32, i32
  }
}

</mosaic_0001>

<llo_original>
// kernel: alignment_loss_pallas.2
$region0: #{alignment_loss_pallas.2}
  #allocation0 [shape = 'u32[]', space=smem, size = 0x4, offset = 0x4, fixed_abs, tag = 'smem constant byte address 0x4 - core index']
  #allocation1 [shape = 'u32[72,128]{1,0:T(1,128)}', space=vmem, size = 0x9000, scoped, tag = 'internal scratch']
  %s0 = inlined_call_operand.vmem [shape: bf16[2,8,32], index: 0, kind: input, shape index: {}]
  %s1 = inlined_call_operand.vmem [shape: f32[1,2,32], index: 1, kind: output, shape index: {}]
  %s2 = sld [smem:[#allocation0]]
  $region18: #{alignment_loss_pallas.2} parent=0
    _
  %s4 = ssub.s32 1, %s2
  %s5 = scalar_select 0, %s4, %s2
  // Predicated region
  $region2: #{alignment_loss_pallas.2} parent=0 // pred_check
    _
  $region3: #{alignment_loss_pallas.2} parent=0 // pred_check_branch
    %7 = sbr.rel (0) target = $region5
  $region4: #{alignment_loss_pallas.2} parent=0 // pred_region
    %s8 = sadd.s32 0, 0
    %p9 = scmp.lt.s32.totalorder %s8, 0
    %s10 = scalar_select %p9, %s8, 0
    %s11 = smul.addr %s10, 4
    %s12 = scalar_lea.vmem %s0, %s11
    %s13 = sadd.s32 0, 0
  $region5: #{alignment_loss_pallas.2} parent=0 // pred_fallthru
    _
  %s14 = sadd.s32 0, 0
  %p15 = scmp.lt.s32.totalorder %s14, 0
  %s16 = scalar_select %p15, %s14, 0
  %s17 = smul.addr %s16, 4
  %s18 = scalar_lea.vmem %s0, %s17
  %s19 = sadd.s32 0, 0
  %p20 = scmp.lt.s32.totalorder %s19, 0
  %s21 = scalar_select %p20, %s19, 0
  %s22 = smul.addr %s21, 4
  %s23 = scalar_lea.vmem %s0, %s22
  %s24 = sadd.s32 0, 0
  %p25 = scmp.eq.s32.totalorder 0, 0
  // Predicated region
  $region6: #{alignment_loss_pallas.2} parent=0 // pred_check
    %p26 = pneg %p25
  $region7: #{alignment_loss_pallas.2} parent=0 // pred_check_branch
    %28 = sbr.rel (%p26) target = $region9
  $region8: #{alignment_loss_pallas.2} parent=0 // pred_region
    %vm29 = vcmask 254976
    %30 = vst.msk [vmem:[%s1] sm:$0x3] %vm29, 0.0
  $region9: #{alignment_loss_pallas.2} parent=0 // pred_fallthru
    _
  %v31 = vld [vmem:[%s23] sm:$0xf]
  %v32 = vld [vmem:[%s23 + $0x4] sm:$0xf]
  %v33 = vunpack.c.l.bf16 %v31
  %v34 = vunpack.c.l.bf16 %v32
  %v35 = vld [vmem:[%s1] sm:$0x3]
  %vm36 = vcmask 261120
  %v37 = vsel %vm36, %v33, 0.0
  %v38 = vrot.slane %v37, 4
  %v39 = vadd.f32 %v37, %v38
  %v40 = vrot.slane %v39, 2
  %v41 = vadd.f32 %v39, %v40
  %v42 = vrot.slane %v41, 1
  %v43 = vadd.f32 %v41, %v42
  %v44 = vsel %vm36, %v34, 0.0
  %v45 = vrot.slane %v44, 4
  %v46 = vadd.f32 %v44, %v45
  %v47 = vrot.slane %v46, 2
  %v48 = vadd.f32 %v46, %v47
  %v49 = vrot.slane %v48, 1
  %v50 = vadd.f32 %v48, %v49
  %vm53 = vcmask 1041409
  %v54 = vsel %vm53, %v50, %v43
  %v56 = vadd.f32 %v35, %v54
  %vm57 = vcmask 254976
  %58 = vst.msk [vmem:[%s1] sm:$0x3] %vm57, %v56
  // Predicated region
  $region10: #{alignment_loss_pallas.2} parent=0 // pred_check
    _
  $region11: #{alignment_loss_pallas.2} parent=0 // pred_check_branch
    %60 = sbr.rel (0) target = $region13
  $region12: #{alignment_loss_pallas.2} parent=0 // pred_region
    _
  $region13: #{alignment_loss_pallas.2} parent=0 // pred_fallthru
    _
  // Predicated region
  $region14: #{alignment_loss_pallas.2} parent=0 // pred_check
    _
  $region15: #{alignment_loss_pallas.2} parent=0 // pred_check_branch
    %62 = sbr.rel (0) target = $region17
  $region16: #{alignment_loss_pallas.2} parent=0 // pred_region
    _
  $region17: #{alignment_loss_pallas.2} parent=0 // pred_fallthru
    _

// kernel: alignment_loss_pallas.3
$region0: #{alignment_loss_pallas.3}
  #allocation0 [shape = 'u32[]', space=smem, size = 0x4, offset = 0x4, fixed_abs, tag = 'smem constant byte address 0x4 - core index']
  #allocation1 [shape = 'u32[72,128]{1,0:T(1,128)}', space=vmem, size = 0x9000, scoped, tag = 'internal scratch']
  %s0 = inlined_call_operand.vmem [shape: f32[2,32], index: 0, kind: input, shape index: {}]
  %s1 = inlined_call_operand.vmem [shape: f32[1,2,32], index: 1, kind: input, shape index: {}]
  %s2 = inlined_call_operand.vmem [shape: f32[32,128], index: 2, kind: input, shape index: {}]
  %s3 = inlined_call_operand.vmem [shape: f32[1,128], index: 3, kind: input, shape index: {}]
  %s4 = inlined_call_operand.vmem [shape: f32[32,128], index: 4, kind: input, shape index: {}]
  %s5 = inlined_call_operand.vmem [shape: f32[1,128], index: 5, kind: input, shape index: {}]
  %s6 = inlined_call_operand.hbm [shape: f32[1,1], index: 6, kind: output, shape index: {}]
  %s7 = sld [smem:[#allocation0]]
  $region34: #{alignment_loss_pallas.3} parent=0
    _
  %s9 = ssub.s32 1, %s7
  %s10 = scalar_select 0, %s9, %s7
  $region1: #{alignment_loss_pallas.3} parent=0
    #allocation2 [shape = 'u8[512]{0}', space=smem, size = 0x200, scoped, tag = 'output window, operand 0, single buffered']
    #allocation3 [shape = 's32[1]{0}', space=sflag, size = 0x4, scoped, tag = 'scoped memory for alignment_loss_pallas.3']
    %11 = vsyncpa [#allocation3], 0
    // Predicated region
    $region2: #{alignment_loss_pallas.3} parent=1 // pred_check
      _
    $region3: #{alignment_loss_pallas.3} parent=1 // pred_check_branch
      %13 = sbr.rel (0) target = $region5
    $region4: #{alignment_loss_pallas.3} parent=1 // pred_region
      _
    $region5: #{alignment_loss_pallas.3} parent=1 // pred_fallthru
      _
    // Predicated region
    $region6: #{alignment_loss_pallas.3} parent=1 // pred_check
      _
    $region7: #{alignment_loss_pallas.3} parent=1 // pred_check_branch
      %15 = sbr.rel (0) target = $region9
    $region8: #{alignment_loss_pallas.3} parent=1 // pred_region
      _
    $region9: #{alignment_loss_pallas.3} parent=1 // pred_fallthru
      _
    // Predicated region
    $region10: #{alignment_loss_pallas.3} parent=1 // pred_check
      _
    $region11: #{alignment_loss_pallas.3} parent=1 // pred_check_branch
      %17 = sbr.rel (0) target = $region13
    $region12: #{alignment_loss_pallas.3} parent=1 // pred_region
      _
    $region13: #{alignment_loss_pallas.3} parent=1 // pred_fallthru
      _
    // Predicated region
    $region14: #{alignment_loss_pallas.3} parent=1 // pred_check
      _
    $region15: #{alignment_loss_pallas.3} parent=1 // pred_check_branch
      %19 = sbr.rel (0) target = $region17
    $region16: #{alignment_loss_pallas.3} parent=1 // pred_region
      _
    $region17: #{alignment_loss_pallas.3} parent=1 // pred_fallthru
      _
    // Predicated region
    $region18: #{alignment_loss_pallas.3} parent=1 // pred_check
      _
    $region19: #{alignment_loss_pallas.3} parent=1 // pred_check_branch
      %21 = sbr.rel (0) target = $region21
    $region20: #{alignment_loss_pallas.3} parent=1 // pred_region
      _
    $region21: #{alignment_loss_pallas.3} parent=1 // pred_fallthru
      _
    // Predicated region
    $region22: #{alignment_loss_pallas.3} parent=1 // pred_check
      _
    $region23: #{alignment_loss_pallas.3} parent=1 // pred_check_branch
      %23 = sbr.rel (0) target = $region25
    $region24: #{alignment_loss_pallas.3} parent=1 // pred_region
      _
    $region25: #{alignment_loss_pallas.3} parent=1 // pred_fallthru
      _
    %v24 = vld [vmem:[%s0] sm:$0x3]
    %v25 = vld [vmem:[%s1] sm:$0x3]
    %v26 = vld [vmem:[%s2] sm:$0xff]
    %v27 = vld [vmem:[%s2 + $0x8] sm:$0xff]
    %v28 = vld [vmem:[%s2 + $0x10] sm:$0xff]
    %v29 = vld [vmem:[%s2 + $0x18] sm:$0xff]
    %v30 = vld [vmem:[%s3] sm:$0x1]
    %v32 = vperm.slane %v30, 0
    %vm34 = vcmask 261120
    %v36 = vsel %vm34, %v24, 0
    %38 = vmatpush.msra.mxu0 0.0
    %39 = vmatpush.msra.mxu0 0.0
    %40 = vmatpush.msra.mxu0 0.0
    %41 = vmatpush.msra.mxu0 0.0
    %42 = vmatpush.msra.mxu0 0.0
    %43 = vmatpush.msra.mxu0 0.0
    %44 = vmatpush.msra.mxu0 0.0
    %45 = vmatpush.msra.mxu0 0.0
    %46 = vmatpush.msra.mxu0 0.0
    %47 = vmatpush.msra.mxu0 0.0
    %48 = vmatpush.msra.mxu0 0.0
    %49 = vmatpush.msra.mxu0 0.0
    %v50 = vand.u32 %v29, 4294901760
    %51 = vmatpush.msra.mxu0 %v50
    %v52 = vand.u32 %v28, 4294901760
    %53 = vmatpush.msra.mxu0 %v52
    %v54 = vand.u32 %v27, 4294901760
    %55 = vmatpush.msra.mxu0 %v54
    %v56 = vand.u32 %v26, 4294901760
    %57 = vmatpush.msra.mxu0 %v56
    %v58 = vand.u32 %v36, 4294901760
    %v59 = vsub.f32 %v36, %v58
    %v60 = vand.u32 %v59, 4294901760
    %v61 = vsub.f32 %v59, %v60
    %v62 = vand.u32 %v61, 4294901760
    %63 = vmatmul.f32.gmra.mxu0 %v62
    %v64 = vpop.f32.mrf.mxu0
    %v65 = vadd.f32 %v32, %v64
    %66 = vdwg.mxu0
    %67 = vmatpush.msra.mxu0 0.0
    %68 = vmatpush.msra.mxu0 0.0
    %69 = vmatpush.msra.mxu0 0.0
    %70 = vmatpush.msra.mxu0 0.0
    %71 = vmatpush.msra.mxu0 0.0
    %72 = vmatpush.msra.mxu0 0.0
    %73 = vmatpush.msra.mxu0 0.0
    %74 = vmatpush.msra.mxu0 0.0
    %75 = vmatpush.msra.mxu0 0.0
    %76 = vmatpush.msra.mxu0 0.0
    %77 = vmatpush.msra.mxu0 0.0
    %78 = vmatpush.msra.mxu0 0.0
    %v79 = vand.u32 %v29, 4294901760
    %v80 = vsub.f32 %v29, %v79
    %v81 = vand.u32 %v80, 4294901760
    %v82 = vsub.f32 %v80, %v81
    %v83 = vand.u32 %v82, 4294901760
    %84 = vmatpush.msra.mxu0 %v83
    %v85 = vand.u32 %v28, 4294901760
    %v86 = vsub.f32 %v28, %v85
    %v87 = vand.u32 %v86, 4294901760
    %v88 = vsub.f32 %v86, %v87
    %v89 = vand.u32 %v88, 4294901760
    %90 = vmatpush.msra.mxu0 %v89
    %v91 = vand.u32 %v27, 4294901760
    %v92 = vsub.f32 %v27, %v91
    %v93 = vand.u32 %v92, 4294901760
    %v94 = vsub.f32 %v92, %v93
    %v95 = vand.u32 %v94, 4294901760
    %96 = vmatpush.msra.mxu0 %v95
    %v97 = vand.u32 %v26, 4294901760
    %v98 = vsub.f32 %v26, %v97
    %v99 = vand.u32 %v98, 4294901760
    %v100 = vsub.f32 %v98, %v99
    %v101 = vand.u32 %v100, 4294901760
    %102 = vmatpush.msra.mxu0 %v101
    %v103 = vand.u32 %v36, 4294901760
    %104 = vmatmul.f32.gmra.mxu0 %v103
    %v105 = vpop.f32.mrf.mxu0
    %v106 = vadd.f32 %v65, %v105
    %107 = vdwg.mxu0
    %108 = vmatpush.msra.mxu0 0.0
    %109 = vmatpush.msra.mxu0 0.0
    %110 = vmatpush.msra.mxu0 0.0
    %111 = vmatpush.msra.mxu0 0.0
    %112 = vmatpush.msra.mxu0 0.0
    %113 = vmatpush.msra.mxu0 0.0
    %114 = vmatpush.msra.mxu0 0.0
    %115 = vmatpush.msra.mxu0 0.0
    %116 = vmatpush.msra.mxu0 0.0
    %117 = vmatpush.msra.mxu0 0.0
    %118 = vmatpush.msra.mxu0 0.0
    %119 = vmatpush.msra.mxu0 0.0
    %v120 = vand.u32 %v29, 4294901760
    %v121 = vsub.f32 %v29, %v120
    %122 = vmatpush.msra.mxu0 %v121
    %v123 = vand.u32 %v28, 4294901760
    %v124 = vsub.f32 %v28, %v123
    %125 = vmatpush.msra.mxu0 %v124
    %v126 = vand.u32 %v27, 4294901760
    %v127 = vsub.f32 %v27, %v126
    %128 = vmatpush.msra.mxu0 %v127
    %v129 = vand.u32 %v26, 4294901760
    %v130 = vsub.f32 %v26, %v129
    %131 = vmatpush.msra.mxu0 %v130
    %v132 = vand.u32 %v36, 4294901760
    %v133 = vsub.f32 %v36, %v132
    %134 = vmatmul.f32.gmra.mxu0 %v133
    %v135 = vpop.f32.mrf.mxu0
    %v136 = vadd.f32 %v106, %v135
    %137 = vdwg.mxu0
    %138 = vmatpush.msra.mxu0 0.0
    %139 = vmatpush.msra.mxu0 0.0
    %140 = vmatpush.msra.mxu0 0.0
    %141 = vmatpush.msra.mxu0 0.0
    %142 = vmatpush.msra.mxu0 0.0
    %143 = vmatpush.msra.mxu0 0.0
    %144 = vmatpush.msra.mxu0 0.0
    %145 = vmatpush.msra.mxu0 0.0
    %146 = vmatpush.msra.mxu0 0.0
    %147 = vmatpush.msra.mxu0 0.0
    %148 = vmatpush.msra.mxu0 0.0
    %149 = vmatpush.msra.mxu0 0.0
    %v150 = vand.u32 %v29, 4294901760
    %151 = vmatpush.msra.mxu0 %v150
    %v152 = vand.u32 %v28, 4294901760
    %153 = vmatpush.msra.mxu0 %v152
    %v154 = vand.u32 %v27, 4294901760
    %155 = vmatpush.msra.mxu0 %v154
    %v156 = vand.u32 %v26, 4294901760
    %157 = vmatpush.msra.mxu0 %v156
    %v158 = vand.u32 %v36, 4294901760
    %v159 = vsub.f32 %v36, %v158
    %v160 = vand.u32 %v159, 4294901760
    %161 = vmatmul.f32.gmra.mxu0 %v160
    %v162 = vpop.f32.mrf.mxu0
    %v163 = vadd.f32 %v136, %v162
    %164 = vdwg.mxu0
    %165 = vmatpush.msra.mxu0 0.0
    %166 = vmatpush.msra.mxu0 0.0
    %167 = vmatpush.msra.mxu0 0.0
    %168 = vmatpush.msra.mxu0 0.0
    %169 = vmatpush.msra.mxu0 0.0
    %170 = vmatpush.msra.mxu0 0.0
    %171 = vmatpush.msra.mxu0 0.0
    %172 = vmatpush.msra.mxu0 0.0
    %173 = vmatpush.msra.mxu0 0.0
    %174 = vmatpush.msra.mxu0 0.0
    %175 = vmatpush.msra.mxu0 0.0
    %176 = vmatpush.msra.mxu0 0.0
    %v177 = vand.u32 %v29, 4294901760
    %v178 = vsub.f32 %v29, %v177
    %v179 = vand.u32 %v178, 4294901760
    %180 = vmatpush.msra.mxu0 %v179
    %v181 = vand.u32 %v28, 4294901760
    %v182 = vsub.f32 %v28, %v181
    %v183 = vand.u32 %v182, 4294901760
    %184 = vmatpush.msra.mxu0 %v183
    %v185 = vand.u32 %v27, 4294901760
    %v186 = vsub.f32 %v27, %v185
    %v187 = vand.u32 %v186, 4294901760
    %188 = vmatpush.msra.mxu0 %v187
    %v189 = vand.u32 %v26, 4294901760
    %v190 = vsub.f32 %v26, %v189
    %v191 = vand.u32 %v190, 4294901760
    %192 = vmatpush.msra.mxu0 %v191
    %v193 = vand.u32 %v36, 4294901760
    %194 = vmatmul.f32.gmra.mxu0 %v193
    %v195 = vpop.f32.mrf.mxu0
    %v196 = vadd.f32 %v163, %v195
    %197 = vdwg.mxu0
    %198 = vmatpush.msra.mxu0 0.0
    %199 = vmatpush.msra.mxu0 0.0
    %200 = vmatpush.msra.mxu0 0.0
    %201 = vmatpush.msra.mxu0 0.0
    %202 = vmatpush.msra.mxu0 0.0
    %203 = vmatpush.msra.mxu0 0.0
    %204 = vmatpush.msra.mxu0 0.0
    %205 = vmatpush.msra.mxu0 0.0
    %206 = vmatpush.msra.mxu0 0.0
    %207 = vmatpush.msra.mxu0 0.0
    %208 = vmatpush.msra.mxu0 0.0
    %209 = vmatpush.msra.mxu0 0.0
    %v210 = vand.u32 %v29, 4294901760
    %211 = vmatpush.msra.mxu0 %v210
    %v212 = vand.u32 %v28, 4294901760
    %213 = vmatpush.msra.mxu0 %v212
    %v214 = vand.u32 %v27, 4294901760
    %215 = vmatpush.msra.mxu0 %v214
    %v216 = vand.u32 %v26, 4294901760
    %217 = vmatpush.msra.mxu0 %v216
    %v218 = vand.u32 %v36, 4294901760
    %219 = vmatmul.f32.gmra.mxu0 %v218
    %v220 = vpop.f32.mrf.mxu0
    %v221 = vadd.f32 %v196, %v220
    %222 = vdwg.mxu0
    %v223 = vld [vmem:[%s4] sm:$0xff]
    %v224 = vld [vmem:[%s4 + $0x8] sm:$0xff]
    %v225 = vld [vmem:[%s4 + $0x10] sm:$0xff]
    %v226 = vld [vmem:[%s4 + $0x18] sm:$0xff]
    %v227 = vld [vmem:[%s5] sm:$0x1]
    %v229 = vperm.slane %v227, 0
    %v232 = vsel %vm34, %v25, 0
    %234 = vmatpush.msra.mxu0 0.0
    %235 = vmatpush.msra.mxu0 0.0
    %236 = vmatpush.msra.mxu0 0.0
    %237 = vmatpush.msra.mxu0 0.0
    %238 = vmatpush.msra.mxu0 0.0
    %239 = vmatpush.msra.mxu0 0.0
    %240 = vmatpush.msra.mxu0 0.0
    %241 = vmatpush.msra.mxu0 0.0
    %242 = vmatpush.msra.mxu0 0.0
    %243 = vmatpush.msra.mxu0 0.0
    %244 = vmatpush.msra.mxu0 0.0
    %245 = vmatpush.msra.mxu0 0.0
    %v246 = vand.u32 %v226, 4294901760
    %247 = vmatpush.msra.mxu0 %v246
    %v248 = vand.u32 %v225, 4294901760
    %249 = vmatpush.msra.mxu0 %v248
    %v250 = vand.u32 %v224, 4294901760
    %251 = vmatpush.msra.mxu0 %v250
    %v252 = vand.u32 %v223, 4294901760
    %253 = vmatpush.msra.mxu0 %v252
    %v254 = vand.u32 %v232, 4294901760
    %v255 = vsub.f32 %v232, %v254
    %v256 = vand.u32 %v255, 4294901760
    %v257 = vsub.f32 %v255, %v256
    %v258 = vand.u32 %v257, 4294901760
    %259 = vmatmul.f32.gmra.mxu0 %v258
    %v260 = vpop.f32.mrf.mxu0
    %v261 = vadd.f32 %v229, %v260
    %262 = vdwg.mxu0
    %263 = vmatpush.msra.mxu0 0.0
    %264 = vmatpush.msra.mxu0 0.0
    %265 = vmatpush.msra.mxu0 0.0
    %266 = vmatpush.msra.mxu0 0.0
    %267 = vmatpush.msra.mxu0 0.0
    %268 = vmatpush.msra.mxu0 0.0
    %269 = vmatpush.msra.mxu0 0.0
    %270 = vmatpush.msra.mxu0 0.0
    %271 = vmatpush.msra.mxu0 0.0
    %272 = vmatpush.msra.mxu0 0.0
    %273 = vmatpush.msra.mxu0 0.0
    %274 = vmatpush.msra.mxu0 0.0
    %v275 = vand.u32 %v226, 4294901760
    %v276 = vsub.f32 %v226, %v275
    %v277 = vand.u32 %v276, 4294901760
    %v278 = vsub.f32 %v276, %v277
    %v279 = vand.u32 %v278, 4294901760
    %280 = vmatpush.msra.mxu0 %v279
    %v281 = vand.u32 %v225, 4294901760
    %v282 = vsub.f32 %v225, %v281
    %v283 = vand.u32 %v282, 4294901760
    %v284 = vsub.f32 %v282, %v283
    %v285 = vand.u32 %v284, 4294901760
    %286 = vmatpush.msra.mxu0 %v285
    %v287 = vand.u32 %v224, 4294901760
    %v288 = vsub.f32 %v224, %v287
    %v289 = vand.u32 %v288, 4294901760
    %v290 = vsub.f32 %v288, %v289
    %v291 = vand.u32 %v290, 4294901760
    %292 = vmatpush.msra.mxu0 %v291
    %v293 = vand.u32 %v223, 4294901760
    %v294 = vsub.f32 %v223, %v293
    %v295 = vand.u32 %v294, 4294901760
    %v296 = vsub.f32 %v294, %v295
    %v297 = vand.u32 %v296, 4294901760
    %298 = vmatpush.msra.mxu0 %v297
    %v299 = vand.u32 %v232, 4294901760
    %300 = vmatmul.f32.gmra.mxu0 %v299
    %v301 = vpop.f32.mrf.mxu0
    %v302 = vadd.f32 %v261, %v301
    %303 = vdwg.mxu0
    %304 = vmatpush.msra.mxu0 0.0
    %305 = vmatpush.msra.mxu0 0.0
    %306 = vmatpush.msra.mxu0 0.0
    %307 = vmatpush.msra.mxu0 0.0
    %308 = vmatpush.msra.mxu0 0.0
    %309 = vmatpush.msra.mxu0 0.0
    %310 = vmatpush.msra.mxu0 0.0
    %311 = vmatpush.msra.mxu0 0.0
    %312 = vmatpush.msra.mxu0 0.0
    %313 = vmatpush.msra.mxu0 0.0
    %314 = vmatpush.msra.mxu0 0.0
    %315 = vmatpush.msra.mxu0 0.0
    %v316 = vand.u32 %v226, 4294901760
    %v317 = vsub.f32 %v226, %v316
    %318 = vmatpush.msra.mxu0 %v317
    %v319 = vand.u32 %v225, 4294901760
    %v320 = vsub.f32 %v225, %v319
    %321 = vmatpush.msra.mxu0 %v320
    %v322 = vand.u32 %v224, 4294901760
    %v323 = vsub.f32 %v224, %v322
    %324 = vmatpush.msra.mxu0 %v323
    %v325 = vand.u32 %v223, 4294901760
    %v326 = vsub.f32 %v223, %v325
    %327 = vmatpush.msra.mxu0 %v326
    %v328 = vand.u32 %v232, 4294901760
    %v329 = vsub.f32 %v232, %v328
    %330 = vmatmul.f32.gmra.mxu0 %v329
    %v331 = vpop.f32.mrf.mxu0
    %v332 = vadd.f32 %v302, %v331
    %333 = vdwg.mxu0
    %334 = vmatpush.msra.mxu0 0.0
    %335 = vmatpush.msra.mxu0 0.0
    %336 = vmatpush.msra.mxu0 0.0
    %337 = vmatpush.msra.mxu0 0.0
    %338 = vmatpush.msra.mxu0 0.0
    %339 = vmatpush.msra.mxu0 0.0
    %340 = vmatpush.msra.mxu0 0.0
    %341 = vmatpush.msra.mxu0 0.0
    %342 = vmatpush.msra.mxu0 0.0
    %343 = vmatpush.msra.mxu0 0.0
    %344 = vmatpush.msra.mxu0 0.0
    %345 = vmatpush.msra.mxu0 0.0
    %v346 = vand.u32 %v226, 4294901760
    %347 = vmatpush.msra.mxu0 %v346
    %v348 = vand.u32 %v225, 4294901760
    %349 = vmatpush.msra.mxu0 %v348
    %v350 = vand.u32 %v224, 4294901760
    %351 = vmatpush.msra.mxu0 %v350
    %v352 = vand.u32 %v223, 4294901760
    %353 = vmatpush.msra.mxu0 %v352
    %v354 = vand.u32 %v232, 4294901760
    %v355 = vsub.f32 %v232, %v354
    %v356 = vand.u32 %v355, 4294901760
    %357 = vmatmul.f32.gmra.mxu0 %v356
    %v358 = vpop.f32.mrf.mxu0
    %v359 = vadd.f32 %v332, %v358
    %360 = vdwg.mxu0
    %361 = vmatpush.msra.mxu0 0.0
    %362 = vmatpush.msra.mxu0 0.0
    %363 = vmatpush.msra.mxu0 0.0
    %364 = vmatpush.msra.mxu0 0.0
    %365 = vmatpush.msra.mxu0 0.0
    %366 = vmatpush.msra.mxu0 0.0
    %367 = vmatpush.msra.mxu0 0.0
    %368 = vmatpush.msra.mxu0 0.0
    %369 = vmatpush.msra.mxu0 0.0
    %370 = vmatpush.msra.mxu0 0.0
    %371 = vmatpush.msra.mxu0 0.0
    %372 = vmatpush.msra.mxu0 0.0
    %v373 = vand.u32 %v226, 4294901760
    %v374 = vsub.f32 %v226, %v373
    %v375 = vand.u32 %v374, 4294901760
    %376 = vmatpush.msra.mxu0 %v375
    %v377 = vand.u32 %v225, 4294901760
    %v378 = vsub.f32 %v225, %v377
    %v379 = vand.u32 %v378, 4294901760
    %380 = vmatpush.msra.mxu0 %v379
    %v381 = vand.u32 %v224, 4294901760
    %v382 = vsub.f32 %v224, %v381
    %v383 = vand.u32 %v382, 4294901760
    %384 = vmatpush.msra.mxu0 %v383
    %v385 = vand.u32 %v223, 4294901760
    %v386 = vsub.f32 %v223, %v385
    %v387 = vand.u32 %v386, 4294901760
    %388 = vmatpush.msra.mxu0 %v387
    %v389 = vand.u32 %v232, 4294901760
    %390 = vmatmul.f32.gmra.mxu0 %v389
    %v391 = vpop.f32.mrf.mxu0
    %v392 = vadd.f32 %v359, %v391
    %393 = vdwg.mxu0
    %394 = vmatpush.msra.mxu0 0.0
    %395 = vmatpush.msra.mxu0 0.0
    %396 = vmatpush.msra.mxu0 0.0
    %397 = vmatpush.msra.mxu0 0.0
    %398 = vmatpush.msra.mxu0 0.0
    %399 = vmatpush.msra.mxu0 0.0
    %400 = vmatpush.msra.mxu0 0.0
    %401 = vmatpush.msra.mxu0 0.0
    %402 = vmatpush.msra.mxu0 0.0
    %403 = vmatpush.msra.mxu0 0.0
    %404 = vmatpush.msra.mxu0 0.0
    %405 = vmatpush.msra.mxu0 0.0
    %v406 = vand.u32 %v226, 4294901760
    %407 = vmatpush.msra.mxu0 %v406
    %v408 = vand.u32 %v225, 4294901760
    %409 = vmatpush.msra.mxu0 %v408
    %v410 = vand.u32 %v224, 4294901760
    %411 = vmatpush.msra.mxu0 %v410
    %v412 = vand.u32 %v223, 4294901760
    %413 = vmatpush.msra.mxu0 %v412
    %v414 = vand.u32 %v232, 4294901760
    %415 = vmatmul.f32.gmra.mxu0 %v414
    %v416 = vpop.f32.mrf.mxu0
    %v417 = vadd.f32 %v392, %v416
    %418 = vdwg.mxu0
    %v419 = vmul.f32 %v221, %v221
    %vm420 = vcmask 1041408
    %v421 = vsel %vm420, %v419, 0.0
    %422 = vadd.xlane.f32.xlu0 %v421
    %v423 = vpop.xlane.xlu0 %422
    %v424 = vmax.f32 %v423, 1e-24
    %v425 = vrsqrt.pop %v424
    %v426 = vmul.f32 %v425, %v424
    %v427 = vmul.f32 %v426, %v425
    %v428 = vmul.f32 0.5, %v427
    %v429 = vsub.f32 1.5, %v428
    %v430 = vmul.f32 %v425, %v429
    %vm431 = vweird.f32 %v424
    %vm432 = vweird.f32 %v425
    %vm433 = vmor %vm431, %vm432
    %v434 = vsel %vm433, %v425, %v430
    %v435 = vmul.f32 %v221, %v434
    %v436 = vmul.f32 %v417, %v417
    %v437 = vsel %vm420, %v436, 0.0
    %438 = vadd.xlane.f32.xlu0 %v437
    %v439 = vpop.xlane.xlu0 %438
    %v440 = vmax.f32 %v439, 1e-24
    %v441 = vrsqrt.pop %v440
    %v442 = vmul.f32 %v441, %v440
    %v443 = vmul.f32 %v442, %v441
    %v444 = vmul.f32 0.5, %v443
    %v445 = vsub.f32 1.5, %v444
    %v446 = vmul.f32 %v441, %v445
    %vm447 = vweird.f32 %v440
    %vm448 = vweird.f32 %v441
    %vm449 = vmor %vm447, %vm448
    %v450 = vsel %vm449, %v441, %v446
    %v451 = vmul.f32 %v417, %v450
    %452 = vmatpush.xpose.msra.mxu0 0.0
    %453 = vmatpush.xpose.msra.mxu0 0.0
    %454 = vmatpush.xpose.msra.mxu0 0.0
    %455 = vmatpush.xpose.msra.mxu0 0.0
    %456 = vmatpush.xpose.msra.mxu0 0.0
    %457 = vmatpush.xpose.msra.mxu0 0.0
    %458 = vmatpush.xpose.msra.mxu0 0.0
    %459 = vmatpush.xpose.msra.mxu0 0.0
    %460 = vmatpush.xpose.msra.mxu0 0.0
    %461 = vmatpush.xpose.msra.mxu0 0.0
    %462 = vmatpush.xpose.msra.mxu0 0.0
    %463 = vmatpush.xpose.msra.mxu0 0.0
    %464 = vmatpush.xpose.msra.mxu0 0.0
    %465 = vmatpush.xpose.msra.mxu0 0.0
    %466 = vmatpush.xpose.msra.mxu0 0.0
    %v467 = vand.u32 %v451, 4294901760
    %468 = vmatpush.xpose.msra.mxu0 %v467
    %v469 = vand.u32 %v435, 4294901760
    %v470 = vsub.f32 %v435, %v469
    %v471 = vand.u32 %v470, 4294901760
    %v472 = vsub.f32 %v470, %v471
    %v473 = vand.u32 %v472, 4294901760
    %474 = vmatmul.f32.gmra.mxu0 %v473
    %v475 = vpop.f32.mrf.mxu0
    %v476 = vadd.f32 0.0, %v475
    %477 = vdwg.mxu0
    %478 = vmatpush.xpose.msra.mxu0 0.0
    %479 = vmatpush.xpose.msra.mxu0 0.0
    %480 = vmatpush.xpose.msra.mxu0 0.0
    %481 = vmatpush.xpose.msra.mxu0 0.0
    %482 = vmatpush.xpose.msra.mxu0 0.0
    %483 = vmatpush.xpose.msra.mxu0 0.0
    %484 = vmatpush.xpose.msra.mxu0 0.0
    %485 = vmatpush.xpose.msra.mxu0 0.0
    %486 = vmatpush.xpose.msra.mxu0 0.0
    %487 = vmatpush.xpose.msra.mxu0 0.0
    %488 = vmatpush.xpose.msra.mxu0 0.0
    %489 = vmatpush.xpose.msra.mxu0 0.0
    %490 = vmatpush.xpose.msra.mxu0 0.0
    %491 = vmatpush.xpose.msra.mxu0 0.0
    %492 = vmatpush.xpose.msra.mxu0 0.0
    %v493 = vand.u32 %v451, 4294901760
    %v494 = vsub.f32 %v451, %v493
    %v495 = vand.u32 %v494, 4294901760
    %v496 = vsub.f32 %v494, %v495
    %v497 = vand.u32 %v496, 4294901760
    %498 = vmatpush.xpose.msra.mxu0 %v497
    %v499 = vand.u32 %v435, 4294901760
    %500 = vmatmul.f32.gmra.mxu0 %v499
    %v501 = vpop.f32.mrf.mxu0
    %v502 = vadd.f32 %v476, %v501
    %503 = vdwg.mxu0
    %504 = vmatpush.xpose.msra.mxu0 0.0
    %505 = vmatpush.xpose.msra.mxu0 0.0
    %506 = vmatpush.xpose.msra.mxu0 0.0
    %507 = vmatpush.xpose.msra.mxu0 0.0
    %508 = vmatpush.xpose.msra.mxu0 0.0
    %509 = vmatpush.xpose.msra.mxu0 0.0
    %510 = vmatpush.xpose.msra.mxu0 0.0
    %511 = vmatpush.xpose.msra.mxu0 0.0
    %512 = vmatpush.xpose.msra.mxu0 0.0
    %513 = vmatpush.xpose.msra.mxu0 0.0
    %514 = vmatpush.xpose.msra.mxu0 0.0
    %515 = vmatpush.xpose.msra.mxu0 0.0
    %516 = vmatpush.xpose.msra.mxu0 0.0
    %517 = vmatpush.xpose.msra.mxu0 0.0
    %518 = vmatpush.xpose.msra.mxu0 0.0
    %v519 = vand.u32 %v451, 4294901760
    %v520 = vsub.f32 %v451, %v519
    %521 = vmatpush.xpose.msra.mxu0 %v520
    %v522 = vand.u32 %v435, 4294901760
    %v523 = vsub.f32 %v435, %v522
    %524 = vmatmul.f32.gmra.mxu0 %v523
    %v525 = vpop.f32.mrf.mxu0
    %v526 = vadd.f32 %v502, %v525
    %527 = vdwg.mxu0
    %528 = vmatpush.xpose.msra.mxu0 0.0
    %529 = vmatpush.xpose.msra.mxu0 0.0
    %530 = vmatpush.xpose.msra.mxu0 0.0
    %531 = vmatpush.xpose.msra.mxu0 0.0
    %532 = vmatpush.xpose.msra.mxu0 0.0
    %533 = vmatpush.xpose.msra.mxu0 0.0
    %534 = vmatpush.xpose.msra.mxu0 0.0
    %535 = vmatpush.xpose.msra.mxu0 0.0
    %536 = vmatpush.xpose.msra.mxu0 0.0
    %537 = vmatpush.xpose.msra.mxu0 0.0
    %538 = vmatpush.xpose.msra.mxu0 0.0
    %539 = vmatpush.xpose.msra.mxu0 0.0
    %540 = vmatpush.xpose.msra.mxu0 0.0
    %541 = vmatpush.xpose.msra.mxu0 0.0
    %542 = vmatpush.xpose.msra.mxu0 0.0
    %v543 = vand.u32 %v451, 4294901760
    %544 = vmatpush.xpose.msra.mxu0 %v543
    %v545 = vand.u32 %v435, 4294901760
    %v546 = vsub.f32 %v435, %v545
    %v547 = vand.u32 %v546, 4294901760
    %548 = vmatmul.f32.gmra.mxu0 %v547
    %v549 = vpop.f32.mrf.mxu0
    %v550 = vadd.f32 %v526, %v549
    %551 = vdwg.mxu0
    %552 = vmatpush.xpose.msra.mxu0 0.0
    %553 = vmatpush.xpose.msra.mxu0 0.0
    %554 = vmatpush.xpose.msra.mxu0 0.0
    %555 = vmatpush.xpose.msra.mxu0 0.0
    %556 = vmatpush.xpose.msra.mxu0 0.0
    %557 = vmatpush.xpose.msra.mxu0 0.0
    %558 = vmatpush.xpose.msra.mxu0 0.0
    %559 = vmatpush.xpose.msra.mxu0 0.0
    %560 = vmatpush.xpose.msra.mxu0 0.0
    %561 = vmatpush.xpose.msra.mxu0 0.0
    %562 = vmatpush.xpose.msra.mxu0 0.0
    %563 = vmatpush.xpose.msra.mxu0 0.0
    %564 = vmatpush.xpose.msra.mxu0 0.0
    %565 = vmatpush.xpose.msra.mxu0 0.0
    %566 = vmatpush.xpose.msra.mxu0 0.0
    %v567 = vand.u32 %v451, 4294901760
    %v568 = vsub.f32 %v451, %v567
    %v569 = vand.u32 %v568, 4294901760
    %570 = vmatpush.xpose.msra.mxu0 %v569
    %v571 = vand.u32 %v435, 4294901760
    %572 = vmatmul.f32.gmra.mxu0 %v571
    %v573 = vpop.f32.mrf.mxu0
    %v574 = vadd.f32 %v550, %v573
    %575 = vdwg.mxu0
    %576 = vmatpush.xpose.msra.mxu0 0.0
    %577 = vmatpush.xpose.msra.mxu0 0.0
    %578 = vmatpush.xpose.msra.mxu0 0.0
    %579 = vmatpush.xpose.msra.mxu0 0.0
    %580 = vmatpush.xpose.msra.mxu0 0.0
    %581 = vmatpush.xpose.msra.mxu0 0.0
    %582 = vmatpush.xpose.msra.mxu0 0.0
    %583 = vmatpush.xpose.msra.mxu0 0.0
    %584 = vmatpush.xpose.msra.mxu0 0.0
    %585 = vmatpush.xpose.msra.mxu0 0.0
    %586 = vmatpush.xpose.msra.mxu0 0.0
    %587 = vmatpush.xpose.msra.mxu0 0.0
    %588 = vmatpush.xpose.msra.mxu0 0.0
    %589 = vmatpush.xpose.msra.mxu0 0.0
    %590 = vmatpush.xpose.msra.mxu0 0.0
    %v591 = vand.u32 %v451, 4294901760
    %592 = vmatpush.xpose.msra.mxu0 %v591
    %v593 = vand.u32 %v435, 4294901760
    %594 = vmatmul.f32.gmra.mxu0 %v593
    %v595 = vpop.f32.mrf.mxu0
    %v596 = vadd.f32 %v574, %v595
    %597 = vdwg.mxu0
    %v598 = vmul.f32 %v435, %v451
    %v599 = vsel %vm420, %v598, 0.0
    %600 = vadd.xlane.f32.xlu0 %v599
    %v601 = vpop.xlane.xlu0 %600
    %vm602 = vcmask 9216
    %v603 = vsel %vm602, %v596, -inf
    %604 = vmax.xlane.f32.xlu0 %v603
    %v605 = vpop.xlane.xlu0 %604
    %v606 = vrot.slane %v605, 4
    %v607 = vmax.f32 %v605, %v606
    %v608 = vrot.slane %v607, 2
    %v609 = vmax.f32 %v607, %v608
    %v610 = vrot.slane %v609, 1
    %v611 = vmax.f32 %v609, %v610
    %s612 = vtos %v611
    %v613 = vstv %s612
    %v614 = vsub.f32 %v596, %v613
    %v615 = vmul.f32 %v614, 1.442695
    %v616 = vpow.pop %v615
    %v617 = vsel %vm602, %v616, 0.0
    %618 = vadd.xlane.f32.xlu0 %v617
    %v619 = vpop.xlane.xlu0 %618
    %v620 = vlog2.pop %v619
    %v621 = vmul.f32 %v620, 0.6931472
    %v622 = vadd.f32 %v613, %v621
    %v623 = vrot.slane %v617, 4
    %v624 = vadd.f32 %v617, %v623
    %v625 = vrot.slane %v624, 2
    %v626 = vadd.f32 %v624, %v625
    %v627 = vrot.slane %v626, 1
    %v628 = vadd.f32 %v626, %v627
    %v629 = vlog2.pop %v628
    %v630 = vmul.f32 %v629, 0.6931472
    %v631 = vadd.f32 %v613, %v630
    %vm632 = vcmask 1024
    %v633 = vsel %vm632, %v622, 0.0
    %634 = vadd.xlane.f32.xlu0 %v633
    %v635 = vpop.xlane.xlu0 %634
    %v636 = vrot.slane %v635, 4
    %v637 = vadd.f32 %v635, %v636
    %v638 = vrot.slane %v637, 2
    %v639 = vadd.f32 %v637, %v638
    %v640 = vrot.slane %v639, 1
    %v641 = vadd.f32 %v639, %v640
    %s642 = vtos %v641
    %v643 = vrcp.pop 2.0
    %v644 = vmul.f32 2.0, %v643
    %v645 = vsub.f32 1.0, %v644
    %v646 = vmul.f32 %v643, %v645
    %v647 = vadd.f32 %v643, %v646
    %vm648 = vweird.f32 %v643
    %v649 = vsel %vm648, %v643, %v647
    %s650 = vtos %v649
    %s651 = smul.f32 %s642, %s650
    %vm652 = vcmask 8192
    %v653 = vsel %vm652, %v631, 0.0
    %654 = vadd.xlane.f32.xlu0 %v653
    %v655 = vpop.xlane.xlu0 %654
    %v656 = vrot.slane %v655, 4
    %v657 = vadd.f32 %v655, %v656
    %v658 = vrot.slane %v657, 2
    %v659 = vadd.f32 %v657, %v658
    %v660 = vrot.slane %v659, 1
    %v661 = vadd.f32 %v659, %v660
    %s662 = vtos %v661
    %v663 = vrcp.pop 2.0
    %v664 = vmul.f32 2.0, %v663
    %v665 = vsub.f32 1.0, %v664
    %v666 = vmul.f32 %v663, %v665
    %v667 = vadd.f32 %v663, %v666
    %vm668 = vweird.f32 %v663
    %v669 = vsel %vm668, %v663, %v667
    %s670 = vtos %v669
    %s671 = smul.f32 %s662, %s670
    %s672 = sadd.f32 %s651, %s671
    %s673 = smul.f32 %s672, 0.5
    %v674 = vsel %vm632, %v601, 0.0
    %675 = vadd.xlane.f32.xlu0 %v674
    %v676 = vpop.xlane.xlu0 %675
    %v677 = vrot.slane %v676, 4
    %v678 = vadd.f32 %v676, %v677
    %v679 = vrot.slane %v678, 2
    %v680 = vadd.f32 %v678, %v679
    %v681 = vrot.slane %v680, 1
    %v682 = vadd.f32 %v680, %v681
    %s683 = vtos %v682
    %v684 = vrcp.pop 2.0
    %v685 = vmul.f32 2.0, %v684
    %v686 = vsub.f32 1.0, %v685
    %v687 = vmul.f32 %v684, %v686
    %v688 = vadd.f32 %v684, %v687
    %vm689 = vweird.f32 %v684
    %v690 = vsel %vm689, %v684, %v688
    %s691 = vtos %v690
    %s692 = smul.f32 %s683, %s691
    %s693 = ssub.f32 %s673, %s692
    %s694 = scalar_lea.smem [#allocation2], 0
    %695 = sst [smem:[%s694]] %s693
    // Predicated region
    $region26: #{alignment_loss_pallas.3} parent=1 // pred_check
      _
    $region27: #{alignment_loss_pallas.3} parent=1 // pred_check_branch
      %697 = sbr.rel (0) target = $region29
    $region28: #{alignment_loss_pallas.3} parent=1 // pred_region
      %699 = vsyncadd [#allocation3], 0
      %s701 = sshll.u32 %s6, 4
      %s702 = int_to_ptr.hbm [resolvable:$true] %s701
      %704 = dma.smem_to_hbm [#allocation2], 16, %s702, [#allocation3]
    $region29: #{alignment_loss_pallas.3} parent=1 // pred_fallthru
      _
    // Predicated region
    $region30: #{alignment_loss_pallas.3} parent=1 // pred_check
      _
    $region31: #{alignment_loss_pallas.3} parent=1 // pred_check_branch
      %706 = sbr.rel (0) target = $region33
    $region32: #{alignment_loss_pallas.3} parent=1 // pred_region
      %708 = dma.done [#allocation3], 16
    $region33: #{alignment_loss_pallas.3} parent=1 // pred_fallthru
      _
    %709 = sfence
    %710 = vsyncpa [#allocation3], 1

</llo_original>
